<compile_context>
chip_gen: v7x
topology: tpu7x:2x2x1
jax: 0.10.0
libtpu: 0.0.40
codegen_flags: <defaults>
</compile_context>

<pallas_src>
import jax
import jax.numpy as jnp
from jax.experimental import pallas as pl
from jax.experimental.pallas import tpu as pltpu

LOG_STD_MAX = 2.0
LOG_STD_MIN = -5.0
_LANE = 128


def _round_up(n, m):
    return ((n + m - 1) // m) * m


def _actor_kernel(x_ref, w1_ref, w2_ref, wh_ref, b12_ref, bh_ref, out_ref):
    # x tile: [TB, F] f32 -> bf16 operand for the MXU (f32 accumulation kept).
    x = x_ref[...].astype(jnp.bfloat16)
    b12 = b12_ref[...]                       # [2, HP] f32 (row 0: b1, row 1: b2)

    # fc1 + ReLU
    h1 = jnp.dot(x, w1_ref[...], preferred_element_type=jnp.float32)
    h1 = jnp.maximum(h1 + b12[0:1, :], 0.0).astype(jnp.bfloat16)

    # fc2 + ReLU
    h2 = jnp.dot(h1, w2_ref[...], preferred_element_type=jnp.float32)
    h2 = jnp.maximum(h2 + b12[1:2, :], 0.0).astype(jnp.bfloat16)

    # fused heads: lane 0 = fc_mean, lane 1 = fc_logstd (raw, squash in wrapper),
    # lanes >= 2 are exact zeros. Single unmasked 128-lane store.
    raw = jnp.dot(h2, wh_ref[...], preferred_element_type=jnp.float32) + bh_ref[...]
    out_ref[...] = raw.astype(out_ref.dtype)


def prepare_params(params, obs_dim):
    """One-time packing (NOT in the hot path): transpose torch-convention
    (out, in) weights to (in, out), zero-pad the hidden dims to 128 lanes,
    fuse the mean/logstd heads into lanes 0/1 of one matrix, cast weights
    to bfloat16 (biases stay f32 and are added to the f32 accumulator)."""
    h1 = params["fc1_w"].shape[0]
    h2 = params["fc2_w"].shape[0]
    hp = _round_up(max(h1, h2, _LANE), _LANE)

    w1 = jnp.zeros((obs_dim, hp), jnp.float32).at[:, :h1].set(params["fc1_w"].T)
    w2 = jnp.zeros((hp, hp), jnp.float32).at[:h1, :h2].set(params["fc2_w"].T)
    wh = jnp.zeros((hp, _LANE), jnp.float32)
    wh = wh.at[:h2, 0].set(params["fc_mean_w"][0])
    wh = wh.at[:h2, 1].set(params["fc_logstd_w"][0])

    b12 = jnp.zeros((2, hp), jnp.float32)
    b12 = b12.at[0, :h1].set(params["fc1_b"])
    b12 = b12.at[1, :h2].set(params["fc2_b"])
    bh = jnp.zeros((1, _LANE), jnp.float32)
    bh = bh.at[0, 0].set(params["fc_mean_b"][0])
    bh = bh.at[0, 1].set(params["fc_logstd_b"][0])

    return {
        "w1": w1.astype(jnp.bfloat16),
        "w2": w2.astype(jnp.bfloat16),
        "wh": wh.astype(jnp.bfloat16),
        "b12": b12,
        "bh": bh,
    }


def _choose_tile(B, cap=512):
    """Tail-balanced batch tile, multiple of 8, >= 2 tiles for mid/large B."""
    if B <= 8:
        return B
    n_tiles = -(-B // cap)
    if n_tiles == 1 and B >= 128:
        # v7x has 2 TensorCores: give the "parallel" grid >= 2 steps.
        n_tiles = 2
    tb = _round_up(-(-B // n_tiles), 8)
    return B if tb >= B else tb


def actor_forward(x, packed):
    """x: [B, F] float32 observations. packed: output of prepare_params."""
    w1, w2, wh = packed["w1"], packed["w2"], packed["wh"]
    b12, bh = packed["b12"], packed["bh"]
    B, F = x.shape
    assert F == w1.shape[0], "observation dim does not match packed params"
    hp = w2.shape[0]
    head = wh.shape[1]

    tb = _choose_tile(B)
    grid = (pl.cdiv(B, tb),)

    flops = 2 * B * (F * hp + hp * hp + hp * head)
    bytes_accessed = (
        x.size * x.dtype.itemsize
        + w1.size * 2 + w2.size * 2 + wh.size * 2
        + b12.size * 4 + bh.size * 4
        + B * head * 4
    )

    out = pl.pallas_call(
        _actor_kernel,
        out_shape=jax.ShapeDtypeStruct((B, head), jnp.float32),
        grid=grid,
        in_specs=[
            pl.BlockSpec((tb, F), lambda i: (i, 0)),       # x tile (unpadded)
            pl.BlockSpec((F, hp), lambda i: (0, 0)),       # W1 (in,out), resident
            pl.BlockSpec((hp, hp), lambda i: (0, 0)),      # W2, resident
            pl.BlockSpec((hp, head), lambda i: (0, 0)),    # fused heads, resident
            pl.BlockSpec((2, hp), lambda i: (0, 0)),       # b1/b2, resident
            pl.BlockSpec((1, head), lambda i: (0, 0)),     # head biases, resident
        ],
        out_specs=pl.BlockSpec((tb, head), lambda i: (i, 0)),
        compiler_params=pltpu.CompilerParams(
            dimension_semantics=("parallel",)),
        cost_estimate=pl.CostEstimate(
            flops=flops, transcendentals=0, bytes_accessed=bytes_accessed),
    )(x, w1, w2, wh, b12, bh)

    mean = out[:, 0:1]
    # log_std squash applied to the single sliced column (tiny fused XLA op)
    # instead of a [tb,128] tanh through the kernel's single EUP slot.
    log_std = LOG_STD_MIN + 0.5 * (LOG_STD_MAX - LOG_STD_MIN) * (
        jnp.tanh(out[:, 1:2]) + 1.0)
    aux_actions = None
    return mean, log_std, aux_actions


def _kaiming_normal_fan_out(key, out_features, in_features):
    # torch.nn.init.kaiming_normal_(mode='fan_out', nonlinearity='relu'):
    # std = sqrt(2 / fan_out), weight shape (out, in)
    std = (2.0 / out_features) ** 0.5
    return std * jax.random.normal(key, (out_features, in_features), jnp.float32)


def make_params(key, obs_dim, mlp_size):
    h1, h2 = mlp_size
    k1, k2, k3, k4 = jax.random.split(key, 4)
    return {
        "fc1_w": _kaiming_normal_fan_out(k1, h1, obs_dim),
        "fc1_b": jnp.zeros((h1,), jnp.float32),
        "fc2_w": _kaiming_normal_fan_out(k2, h2, h1),
        "fc2_b": jnp.zeros((h2,), jnp.float32),
        "fc_mean_w": _kaiming_normal_fan_out(k3, 1, h2),
        "fc_mean_b": jnp.zeros((1,), jnp.float32),
        "fc_logstd_w": _kaiming_normal_fan_out(k4, 1, h2),
        "fc_logstd_b": jnp.zeros((1,), jnp.float32),
    }


def _reference_forward_f32(x, p):
    h1 = jax.nn.relu(x @ p["fc1_w"].T + p["fc1_b"])
    h2 = jax.nn.relu(h1 @ p["fc2_w"].T + p["fc2_b"])
    mean = h2 @ p["fc_mean_w"].T + p["fc_mean_b"]
    log_std = jnp.tanh(h2 @ p["fc_logstd_w"].T + p["fc_logstd_b"])
    log_std = LOG_STD_MIN + 0.5 * (LOG_STD_MAX - LOG_STD_MIN) * (log_std + 1.0)
    return mean, log_std


def _reference_forward_bf16(x, p):
    # Emulates the kernel's numerics: bf16 MXU operands, f32 accumulation/biases.
    bf, f32 = jnp.bfloat16, jnp.float32
    h1 = jnp.dot(x.astype(bf), p["fc1_w"].astype(bf).T,
                 preferred_element_type=f32) + p["fc1_b"]
    h1 = jnp.maximum(h1, 0.0).astype(bf)
    h2 = jnp.dot(h1, p["fc2_w"].astype(bf).T,
                 preferred_element_type=f32) + p["fc2_b"]
    h2 = jnp.maximum(h2, 0.0).astype(bf)
    mean = jnp.dot(h2, p["fc_mean_w"].astype(bf).T,
                   preferred_element_type=f32) + p["fc_mean_b"]
    raw = jnp.dot(h2, p["fc_logstd_w"].astype(bf).T,
                  preferred_element_type=f32) + p["fc_logstd_b"]
    log_std = LOG_STD_MIN + 0.5 * (LOG_STD_MAX - LOG_STD_MIN) * (jnp.tanh(raw) + 1.0)
    return mean, log_std


if __name__ == "__main__":
    key = jax.random.PRNGKey(0)
    k_x, k_p, k_b, k_x2 = jax.random.split(key, 4)

    batch = 8          # N_ENVS-like small batch
    obs_dim = 64       # flattened observation (e.g. 8x8 board)
    mlp_size = (32, 32)

    params = make_params(k_p, obs_dim, mlp_size)
    packed = prepare_params(params, obs_dim)
    fwd = jax.jit(actor_forward)

    x = jax.random.normal(k_x, (batch, obs_dim), jnp.float32)
    mean, log_std, aux = fwd(x, packed)
    jax.block_until_ready((mean, log_std))

    assert mean.shape == (batch, 1) and log_std.shape == (batch, 1)
    assert aux is None
    # tight check against a bf16-emulating JAX reference (same numerics)
    ref_mean, ref_log_std = _reference_forward_bf16(x, params)
    assert jnp.allclose(mean, ref_mean, atol=1e-4, rtol=1e-4)
    assert jnp.allclose(log_std, ref_log_std, atol=1e-4, rtol=1e-4)
    # loose semantic check against the full-f32 reference (bf16 tolerance)
    f_mean, f_log_std = _reference_forward_f32(x, params)
    assert jnp.max(jnp.abs(mean - f_mean)) < 1.0
    assert jnp.max(jnp.abs(log_std - f_log_std)) < 1.5

    # second check: non-zero biases + batch=300 exercising 2 balanced tiles
    # (tb=152) with a masked 4-row tail block.
    params2 = dict(params)
    bkeys = jax.random.split(k_b, 4)
    params2["fc1_b"] = 0.1 * jax.random.normal(bkeys[0], (mlp_size[0],), jnp.float32)
    params2["fc2_b"] = 0.1 * jax.random.normal(bkeys[1], (mlp_size[1],), jnp.float32)
    params2["fc_mean_b"] = 0.1 * jax.random.normal(bkeys[2], (1,), jnp.float32)
    params2["fc_logstd_b"] = 0.1 * jax.random.normal(bkeys[3], (1,), jnp.float32)
    packed2 = prepare_params(params2, obs_dim)

    x2 = jax.random.normal(k_x2, (300, obs_dim), jnp.float32)
    mean2, log_std2, _ = fwd(x2, packed2)
    jax.block_until_ready((mean2, log_std2))
    ref_mean2, ref_log_std2 = _reference_forward_bf16(x2, params2)
    assert jnp.allclose(mean2, ref_mean2, atol=1e-4, rtol=1e-4)
    assert jnp.allclose(log_std2, ref_log_std2, atol=1e-4, rtol=1e-4)

    print("KERNEL_OK")
</pallas_src>

<mosaic_0001>
module attributes {stable_mosaic.version = 11 : i64} {
  func.func @_actor_kernel(%arg0: i32, %arg1: memref<8x64xf32, #tpu.memory_space<vmem>>, %arg2: memref<64x128xbf16, #tpu.memory_space<vmem>>, %arg3: memref<128x128xbf16, #tpu.memory_space<vmem>>, %arg4: memref<128x128xbf16, #tpu.memory_space<vmem>>, %arg5: memref<2x128xf32, #tpu.memory_space<vmem>>, %arg6: memref<1x128xf32, #tpu.memory_space<vmem>>, %arg7: memref<8x128xf32, #tpu.memory_space<vmem>>) attributes {dimension_semantics = [#tpu.dimension_semantics<parallel>], iteration_bounds = array<i64: 1>, scalar_prefetch = 0 : i64, scratch_operands = 0 : i64, tpu.core_type = #tpu.core_type<tc>, window_params = [{transform_indices = @transform_0, window_bounds = array<i64: 8, 64>}, {pipeline_mode = #tpu.pipeline_mode<synchronous>, transform_indices = @transform_1, window_bounds = array<i64: 64, 128>}, {pipeline_mode = #tpu.pipeline_mode<synchronous>, transform_indices = @transform_2, window_bounds = array<i64: 128, 128>}, {pipeline_mode = #tpu.pipeline_mode<synchronous>, transform_indices = @transform_3, window_bounds = array<i64: 128, 128>}, {pipeline_mode = #tpu.pipeline_mode<synchronous>, transform_indices = @transform_4, window_bounds = array<i64: 2, 128>}, {pipeline_mode = #tpu.pipeline_mode<synchronous>, transform_indices = @transform_5, window_bounds = array<i64: 1, 128>}, {transform_indices = @transform_6, window_bounds = array<i64: 8, 128>}]} {
    %c0 = arith.constant 0 : index
    %c0_0 = arith.constant 0 : index
    %0 = vector.load %arg1[%c0, %c0_0] : memref<8x64xf32, #tpu.memory_space<vmem>>, vector<8x64xf32>
    %1 = arith.truncf %0 : vector<8x64xf32> to vector<8x64xbf16>
    %c0_1 = arith.constant 0 : index
    %c0_2 = arith.constant 0 : index
    %2 = vector.load %arg5[%c0_1, %c0_2] : memref<2x128xf32, #tpu.memory_space<vmem>>, vector<2x128xf32>
    %c0_3 = arith.constant 0 : index
    %c0_4 = arith.constant 0 : index
    %3 = vector.load %arg2[%c0_3, %c0_4] : memref<64x128xbf16, #tpu.memory_space<vmem>>, vector<64x128xbf16>
    %cst = arith.constant dense<0.000000e+00> : vector<8x128xf32>
    %4 = tpu.matmul %1, %3, %cst {dimension_numbers = #tpu.dot_dimension_numbers<[1], [0], [0], [1], [0, 0, 1, 1], [], []>} : vector<8x64xbf16>, vector<64x128xbf16>, vector<8x128xf32> -> vector<8x128xf32>
    %5 = vector.extract_strided_slice %2 {offsets = [0, 0], sizes = [1, 128], strides = [1, 1]} : vector<2x128xf32> to vector<1x128xf32>
    %6 = vector.broadcast %5 : vector<1x128xf32> to vector<8x128xf32>
    %7 = arith.addf %4, %6 : vector<8x128xf32>
    %cst_5 = arith.constant 0.000000e+00 : f32
    %8 = vector.broadcast %cst_5 : f32 to vector<8x128xf32>
    %9 = arith.maximumf %7, %8 : vector<8x128xf32>
    %10 = arith.truncf %9 : vector<8x128xf32> to vector<8x128xbf16>
    %c0_6 = arith.constant 0 : index
    %c0_7 = arith.constant 0 : index
    %11 = vector.load %arg3[%c0_6, %c0_7] : memref<128x128xbf16, #tpu.memory_space<vmem>>, vector<128x128xbf16>
    %cst_8 = arith.constant dense<0.000000e+00> : vector<8x128xf32>
    %12 = tpu.matmul %10, %11, %cst_8 {dimension_numbers = #tpu.dot_dimension_numbers<[1], [0], [0], [1], [0, 0, 1, 1], [], []>} : vector<8x128xbf16>, vector<128x128xbf16>, vector<8x128xf32> -> vector<8x128xf32>
    %13 = vector.extract_strided_slice %2 {offsets = [1, 0], sizes = [1, 128], strides = [1, 1]} : vector<2x128xf32> to vector<1x128xf32>
    %14 = vector.broadcast %13 : vector<1x128xf32> to vector<8x128xf32>
    %15 = arith.addf %12, %14 : vector<8x128xf32>
    %cst_9 = arith.constant 0.000000e+00 : f32
    %16 = vector.broadcast %cst_9 : f32 to vector<8x128xf32>
    %17 = arith.maximumf %15, %16 : vector<8x128xf32>
    %18 = arith.truncf %17 : vector<8x128xf32> to vector<8x128xbf16>
    %c0_10 = arith.constant 0 : index
    %c0_11 = arith.constant 0 : index
    %19 = vector.load %arg4[%c0_10, %c0_11] : memref<128x128xbf16, #tpu.memory_space<vmem>>, vector<128x128xbf16>
    %cst_12 = arith.constant dense<0.000000e+00> : vector<8x128xf32>
    %20 = tpu.matmul %18, %19, %cst_12 {dimension_numbers = #tpu.dot_dimension_numbers<[1], [0], [0], [1], [0, 0, 1, 1], [], []>} : vector<8x128xbf16>, vector<128x128xbf16>, vector<8x128xf32> -> vector<8x128xf32>
    %c0_13 = arith.constant 0 : index
    %c0_14 = arith.constant 0 : index
    %21 = vector.load %arg6[%c0_13, %c0_14] : memref<1x128xf32, #tpu.memory_space<vmem>>, vector<1x128xf32>
    %22 = vector.broadcast %21 : vector<1x128xf32> to vector<8x128xf32>
    %23 = arith.addf %20, %22 : vector<8x128xf32>
    %c0_15 = arith.constant 0 : index
    %c0_16 = arith.constant 0 : index
    %24 = vector.load %arg7[%c0_15, %c0_16] : memref<8x128xf32, #tpu.memory_space<vmem>>, vector<8x128xf32>
    tpu.vector_store %arg7[%c0_15, %c0_16], %23 {strides = array<i32>} : memref<8x128xf32, #tpu.memory_space<vmem>>, vector<8x128xf32>,
    return
  }
  func.func @transform_0(%arg0: i32) -> (i32, i32) {
    %c0_i32 = arith.constant 0 : i32
    %c0_i32_0 = arith.constant 0 : i32
    return %arg0, %c0_i32 : i32, i32
  }
  func.func @transform_1(%arg0: i32) -> (i32, i32) {
    %c0_i32 = arith.constant 0 : i32
    %c0_i32_0 = arith.constant 0 : i32
    %c0_i32_1 = arith.constant 0 : i32
    return %c0_i32, %c0_i32_0 : i32, i32
  }
  func.func @transform_2(%arg0: i32) -> (i32, i32) {
    %c0_i32 = arith.constant 0 : i32
    %c0_i32_0 = arith.constant 0 : i32
    %c0_i32_1 = arith.constant 0 : i32
    return %c0_i32, %c0_i32_0 : i32, i32
  }
  func.func @transform_3(%arg0: i32) -> (i32, i32) {
    %c0_i32 = arith.constant 0 : i32
    %c0_i32_0 = arith.constant 0 : i32
    %c0_i32_1 = arith.constant 0 : i32
    return %c0_i32, %c0_i32_0 : i32, i32
  }
  func.func @transform_4(%arg0: i32) -> (i32, i32) {
    %c0_i32 = arith.constant 0 : i32
    %c0_i32_0 = arith.constant 0 : i32
    %c0_i32_1 = arith.constant 0 : i32
    return %c0_i32, %c0_i32_0 : i32, i32
  }
  func.func @transform_5(%arg0: i32) -> (i32, i32) {
    %c0_i32 = arith.constant 0 : i32
    %c0_i32_0 = arith.constant 0 : i32
    %c0_i32_1 = arith.constant 0 : i32
    return %c0_i32, %c0_i32_0 : i32, i32
  }
  func.func @transform_6(%arg0: i32) -> (i32, i32) {
    %c0_i32 = arith.constant 0 : i32
    %c0_i32_0 = arith.constant 0 : i32
    return %arg0, %c0_i32 : i32, i32
  }
}

</mosaic_0001>

<llo_original>
// kernel: actor_forward.1
$region0: #{actor_forward.1}
  #allocation0 [shape = 'u32[]', space=smem, size = 0x4, offset = 0x4, fixed_abs, tag = 'smem constant byte address 0x4 - core index']
  #allocation1 [shape = 'u32[144,128]{1,0:T(1,128)}', space=vmem, size = 0x12000, scoped, tag = 'internal scratch']
  %s0 = inlined_call_operand.hbm [shape: f32[8,64], index: 0, kind: input, shape index: {}]
  %s1 = inlined_call_operand.hbm [shape: bf16[64,128], index: 1, kind: input, shape index: {}]
  %s2 = inlined_call_operand.hbm [shape: bf16[128,128], index: 2, kind: input, shape index: {}]
  %s3 = inlined_call_operand.hbm [shape: bf16[128,128], index: 3, kind: input, shape index: {}]
  %s4 = inlined_call_operand.vmem [shape: f32[2,128], index: 4, kind: input, shape index: {}]
  %s5 = inlined_call_operand.vmem [shape: f32[1,128], index: 5, kind: input, shape index: {}]
  %s6 = inlined_call_operand.vmem [shape: f32[8,128], index: 6, kind: output, shape index: {}]
  %s7 = sld [smem:[#allocation0]]
  $region50: #{actor_forward.1} parent=0
    _
  %s9 = ssub.s32 1, %s7
  %s10 = scalar_select 0, %s9, %s7
  $region1: #{actor_forward.1} parent=0
    #allocation2 [shape = 'u8[4096]{0}', space=vmem, size = 0x1000, scoped, tag = 'input window, operand 0, single buffered']
    #allocation3 [shape = 's32[1]{0}', space=sflag, size = 0x4, scoped, tag = 'scoped memory for actor_forward.1']
    #allocation4 [shape = 'u8[16384]{0}', space=vmem, size = 0x4000, scoped, tag = 'input window, operand 1, single buffered']
    #allocation5 [shape = 's32[1]{0}', space=sflag, size = 0x4, scoped, tag = 'scoped memory for actor_forward.1']
    #allocation6 [shape = 'u8[32768]{0}', space=vmem, size = 0x8000, scoped, tag = 'input window, operand 2, single buffered']
    #allocation7 [shape = 'u8[32768]{0}', space=vmem, size = 0x8000, scoped, tag = 'input window, operand 3, single buffered']
    #allocation8 [shape = 's32[1]{0}', space=sflag, size = 0x4, scoped, tag = 'scoped memory for actor_forward.1']
    %11 = vsyncpa [#allocation3], 0
    %12 = vsyncpa [#allocation5], 0
    %13 = vsyncpa [#allocation8], 0
    // Predicated region
    $region2: #{actor_forward.1} parent=1 // pred_check
      _
    $region3: #{actor_forward.1} parent=1 // pred_check_branch
      %15 = sbr.rel (0) target = $region5
    $region4: #{actor_forward.1} parent=1 // pred_region
      %s17 = ssub.s32 128, 128
      %18 = vsyncadd [#allocation3], %s17
      %s20 = sshll.u32 [#allocation2], 4
      %s21 = int_to_ptr.vmem [resolvable:$true] %s20
      %23 = dma.hbm_to_vmem [thread:$0]  %s0, 128, %s21, [#allocation3]
    $region5: #{actor_forward.1} parent=1 // pred_fallthru
      _
    // Predicated region
    $region6: #{actor_forward.1} parent=1 // pred_check
      _
    $region7: #{actor_forward.1} parent=1 // pred_check_branch
      %25 = sbr.rel (0) target = $region9
    $region8: #{actor_forward.1} parent=1 // pred_region
      %s27 = ssub.s32 512, 512
      %28 = vsyncadd [#allocation5], %s27
      %s29 = sshll.u32 [#allocation4], 4
      %s30 = int_to_ptr.vmem [resolvable:$true] %s29
      %35 = dma.hbm_to_vmem [thread:$0]  %s1, 512, %s30, [#allocation5], 64, 64, 4
    $region9: #{actor_forward.1} parent=1 // pred_fallthru
      _
    // Predicated region
    $region10: #{actor_forward.1} parent=1 // pred_check
      _
    $region11: #{actor_forward.1} parent=1 // pred_check_branch
      %37 = sbr.rel (0) target = $region13
    $region12: #{actor_forward.1} parent=1 // pred_region
      %s39 = ssub.s32 1024, 1024
      %40 = vsyncadd [#allocation5], %s39
      %s41 = sshll.u32 [#allocation6], 4
      %s42 = int_to_ptr.vmem [resolvable:$true] %s41
      %47 = dma.hbm_to_vmem [thread:$0]  %s2, 1024, %s42, [#allocation5], 64, 64, 4
    $region13: #{actor_forward.1} parent=1 // pred_fallthru
      _
    // Predicated region
    $region14: #{actor_forward.1} parent=1 // pred_check
      _
    $region15: #{actor_forward.1} parent=1 // pred_check_branch
      %49 = sbr.rel (0) target = $region17
    $region16: #{actor_forward.1} parent=1 // pred_region
      %s51 = ssub.s32 1024, 1024
      %52 = vsyncadd [#allocation8], %s51
      %s53 = sshll.u32 [#allocation7], 4
      %s54 = int_to_ptr.vmem [resolvable:$true] %s53
      %59 = dma.hbm_to_vmem [thread:$0]  %s3, 1024, %s54, [#allocation8], 64, 64, 4
    $region17: #{actor_forward.1} parent=1 // pred_fallthru
      _
    // Predicated region
    $region18: #{actor_forward.1} parent=1 // pred_check
      _
    $region19: #{actor_forward.1} parent=1 // pred_check_branch
      %61 = sbr.rel (0) target = $region21
    $region20: #{actor_forward.1} parent=1 // pred_region
      _
    $region21: #{actor_forward.1} parent=1 // pred_fallthru
      _
    // Predicated region
    $region22: #{actor_forward.1} parent=1 // pred_check
      _
    $region23: #{actor_forward.1} parent=1 // pred_check_branch
      %63 = sbr.rel (0) target = $region25
    $region24: #{actor_forward.1} parent=1 // pred_region
      _
    $region25: #{actor_forward.1} parent=1 // pred_fallthru
      _
    // Predicated region
    $region26: #{actor_forward.1} parent=1 // pred_check
      _
    $region27: #{actor_forward.1} parent=1 // pred_check_branch
      %65 = sbr.rel (0) target = $region29
    $region28: #{actor_forward.1} parent=1 // pred_region
      %66 = dma.done [#allocation3], 128
    $region29: #{actor_forward.1} parent=1 // pred_fallthru
      _
    // Predicated region
    $region30: #{actor_forward.1} parent=1 // pred_check
      _
    $region31: #{actor_forward.1} parent=1 // pred_check_branch
      %68 = sbr.rel (0) target = $region33
    $region32: #{actor_forward.1} parent=1 // pred_region
      %69 = dma.done [#allocation5], 512
    $region33: #{actor_forward.1} parent=1 // pred_fallthru
      _
    // Predicated region
    $region34: #{actor_forward.1} parent=1 // pred_check
      _
    $region35: #{actor_forward.1} parent=1 // pred_check_branch
      %71 = sbr.rel (0) target = $region37
    $region36: #{actor_forward.1} parent=1 // pred_region
      %72 = dma.done [#allocation5], 1024
    $region37: #{actor_forward.1} parent=1 // pred_fallthru
      _
    // Predicated region
    $region38: #{actor_forward.1} parent=1 // pred_check
      _
    $region39: #{actor_forward.1} parent=1 // pred_check_branch
      %74 = sbr.rel (0) target = $region41
    $region40: #{actor_forward.1} parent=1 // pred_region
      %75 = dma.done [#allocation8], 1024
    $region41: #{actor_forward.1} parent=1 // pred_fallthru
      _
    %v77 = vld [vmem:[#allocation2] sm:$0xff]
    %v78 = vpack.c.bf16 %v77, %v77
    %v79 = vld [vmem:[%s4] sm:$0x3]
    %v80 = vld [vmem:[#allocation4] sm:$0xf]
    %v81 = vld [vmem:[#allocation4 + $0x4] sm:$0xf]
    %v82 = vld [vmem:[#allocation4 + $0x8] sm:$0xf]
    %v83 = vld [vmem:[#allocation4 + $0xc] sm:$0xf]
    %v84 = vld [vmem:[#allocation4 + $0x10] sm:$0xf]
    %v85 = vld [vmem:[#allocation4 + $0x14] sm:$0xf]
    %v86 = vld [vmem:[#allocation4 + $0x18] sm:$0xf]
    %v87 = vld [vmem:[#allocation4 + $0x1c] sm:$0xf]
    %v88 = vlaneseq
    %v89 = vshrl.u32 %v88, 7
    %v90 = vsub.s32 0, %v89
    %v91 = vrot.slane %v79, %v90
    %v100 = vunpack.c.l.b16 %v80
    %v101 = vunpack.c.l.b16 %v81
    %v102 = vunpack.c.l.b16 %v82
    %v103 = vunpack.c.l.b16 %v83
    %v104 = vunpack.c.l.b16 %v84
    %v105 = vunpack.c.l.b16 %v85
    %v106 = vunpack.c.l.b16 %v86
    %v107 = vunpack.c.l.b16 %v87
    %v108 = vpack.c.b16 %v101, %v100
    %v109 = vpack.c.b16 %v103, %v102
    %v110 = vpack.c.b16 %v105, %v104
    %v111 = vpack.c.b16 %v107, %v106
    %vm116 = vcmask 523264
    %v118 = vsel %vm116, %v78, 0
    %120 = vmatprep.subr.bf16.mxu0 0
    %121 = vmatpush1.bf16.msra.mxu0 %v108
    %122 = vmatprep.subr.bf16.mxu0 0
    %123 = vmatpush1.bf16.msra.mxu0 %v109
    %124 = vmatprep.subr.bf16.mxu0 0
    %125 = vmatpush1.bf16.msra.mxu0 %v110
    %126 = vmatprep.subr.bf16.mxu0 0
    %127 = vmatpush1.bf16.msra.mxu0 %v111
    %128 = vmatprep.subr.bf16.mxu0 0
    %129 = vmatpush1.bf16.msra.mxu0 0
    %130 = vmatprep.subr.bf16.mxu0 0
    %131 = vmatpush1.bf16.msra.mxu0 0
    %132 = vmatprep.subr.bf16.mxu0 0
    %133 = vmatpush1.bf16.msra.mxu0 0
    %134 = vmatprep.subr.bf16.mxu0 0
    %135 = vmatpush1.bf16.msra.mxu0 0
    %136 = vmatprep.subr.bf16.mxu0 0
    %137 = vmatpush1.bf16.msra.mxu0 0
    %138 = vmatprep.subr.bf16.mxu0 0
    %139 = vmatpush1.bf16.msra.mxu0 0
    %140 = vmatprep.subr.bf16.mxu0 0
    %141 = vmatpush1.bf16.msra.mxu0 0
    %142 = vmatprep.subr.bf16.mxu0 0
    %143 = vmatpush1.bf16.msra.mxu0 0
    %144 = vmatprep.subr.bf16.mxu0 0
    %145 = vmatpush1.bf16.msra.mxu0 0
    %146 = vmatprep.subr.bf16.mxu0 0
    %147 = vmatpush1.bf16.msra.mxu0 0
    %148 = vmatprep.subr.bf16.mxu0 0
    %149 = vmatpush1.bf16.msra.mxu0 0
    %150 = vmatprep.subr.bf16.mxu0 0
    %151 = vmatpush1.bf16.msra.mxu0 0
    %152 = vmatprep.mubr.bf16.mxu0 0
    %153 = vmatmul.mubr.bf16.gmra.mrb[0].mxu0 %v118
    %v154 = vpop.f32.mrb[0].mxu0
    %v155 = vadd.f32 %v91, %v154
    %v156 = vpop.f32.mrb[0].mxu0
    %v157 = vpop.f32.mrb[0].mxu0
    %v158 = vpop.f32.mrb[0].mxu0
    %159 = vdwg.mxu0
    %v160 = vmax.f32 %v155, 0.0
    %v161 = vpack.c.bf16 %v160, %v160
    %v162 = vld [vmem:[#allocation6] sm:$0xf]
    %v163 = vld [vmem:[#allocation6 + $0x4] sm:$0xf]
    %v164 = vld [vmem:[#allocation6 + $0x8] sm:$0xf]
    %v165 = vld [vmem:[#allocation6 + $0xc] sm:$0xf]
    %v166 = vld [vmem:[#allocation6 + $0x10] sm:$0xf]
    %v167 = vld [vmem:[#allocation6 + $0x14] sm:$0xf]
    %v168 = vld [vmem:[#allocation6 + $0x18] sm:$0xf]
    %v169 = vld [vmem:[#allocation6 + $0x1c] sm:$0xf]
    %v170 = vld [vmem:[#allocation6 + $0x20] sm:$0xf]
    %v171 = vld [vmem:[#allocation6 + $0x24] sm:$0xf]
    %v172 = vld [vmem:[#allocation6 + $0x28] sm:$0xf]
    %v173 = vld [vmem:[#allocation6 + $0x2c] sm:$0xf]
    %v174 = vld [vmem:[#allocation6 + $0x30] sm:$0xf]
    %v175 = vld [vmem:[#allocation6 + $0x34] sm:$0xf]
    %v176 = vld [vmem:[#allocation6 + $0x38] sm:$0xf]
    %v177 = vld [vmem:[#allocation6 + $0x3c] sm:$0xf]
    %v178 = vlaneseq
    %v179 = vshrl.u32 %v178, 7
    %v180 = vsub.s32 1, %v179
    %v181 = vrot.slane %v79, %v180
    %v198 = vunpack.c.l.b16 %v162
    %v199 = vunpack.c.l.b16 %v163
    %v200 = vunpack.c.l.b16 %v164
    %v201 = vunpack.c.l.b16 %v165
    %v202 = vunpack.c.l.b16 %v166
    %v203 = vunpack.c.l.b16 %v167
    %v204 = vunpack.c.l.b16 %v168
    %v205 = vunpack.c.l.b16 %v169
    %v206 = vunpack.c.l.b16 %v170
    %v207 = vunpack.c.l.b16 %v171
    %v208 = vunpack.c.l.b16 %v172
    %v209 = vunpack.c.l.b16 %v173
    %v210 = vunpack.c.l.b16 %v174
    %v211 = vunpack.c.l.b16 %v175
    %v212 = vunpack.c.l.b16 %v176
    %v213 = vunpack.c.l.b16 %v177
    %v214 = vpack.c.b16 %v199, %v198
    %v215 = vpack.c.b16 %v201, %v200
    %v216 = vpack.c.b16 %v203, %v202
    %v217 = vpack.c.b16 %v205, %v204
    %v218 = vpack.c.b16 %v207, %v206
    %v219 = vpack.c.b16 %v209, %v208
    %v220 = vpack.c.b16 %v211, %v210
    %v221 = vpack.c.b16 %v213, %v212
    %230 = vmatprep.subr.bf16.mxu0 0
    %231 = vmatpush1.bf16.msra.mxu0 %v214
    %232 = vmatprep.subr.bf16.mxu0 0
    %233 = vmatpush1.bf16.msra.mxu0 %v215
    %234 = vmatprep.subr.bf16.mxu0 0
    %235 = vmatpush1.bf16.msra.mxu0 %v216
    %236 = vmatprep.subr.bf16.mxu0 0
    %237 = vmatpush1.bf16.msra.mxu0 %v217
    %238 = vmatprep.subr.bf16.mxu0 0
    %239 = vmatpush1.bf16.msra.mxu0 %v218
    %240 = vmatprep.subr.bf16.mxu0 0
    %241 = vmatpush1.bf16.msra.mxu0 %v219
    %242 = vmatprep.subr.bf16.mxu0 0
    %243 = vmatpush1.bf16.msra.mxu0 %v220
    %244 = vmatprep.subr.bf16.mxu0 0
    %245 = vmatpush1.bf16.msra.mxu0 %v221
    %246 = vmatprep.subr.bf16.mxu0 0
    %247 = vmatpush1.bf16.msra.mxu0 0
    %248 = vmatprep.subr.bf16.mxu0 0
    %249 = vmatpush1.bf16.msra.mxu0 0
    %250 = vmatprep.subr.bf16.mxu0 0
    %251 = vmatpush1.bf16.msra.mxu0 0
    %252 = vmatprep.subr.bf16.mxu0 0
    %253 = vmatpush1.bf16.msra.mxu0 0
    %254 = vmatprep.subr.bf16.mxu0 0
    %255 = vmatpush1.bf16.msra.mxu0 0
    %256 = vmatprep.subr.bf16.mxu0 0
    %257 = vmatpush1.bf16.msra.mxu0 0
    %258 = vmatprep.subr.bf16.mxu0 0
    %259 = vmatpush1.bf16.msra.mxu0 0
    %260 = vmatprep.subr.bf16.mxu0 0
    %261 = vmatpush1.bf16.msra.mxu0 0
    %262 = vmatprep.mubr.bf16.mxu0 0
    %263 = vmatmul.mubr.bf16.gmra.mrb[0].mxu0 %v161
    %v264 = vpop.f32.mrb[0].mxu0
    %v265 = vadd.f32 %v181, %v264
    %v266 = vpop.f32.mrb[0].mxu0
    %v267 = vpop.f32.mrb[0].mxu0
    %v268 = vpop.f32.mrb[0].mxu0
    %269 = vdwg.mxu0
    %v270 = vmax.f32 %v265, 0.0
    %v271 = vpack.c.bf16 %v270, %v270
    %v272 = vld [vmem:[#allocation7] sm:$0xf]
    %v273 = vld [vmem:[#allocation7 + $0x4] sm:$0xf]
    %v274 = vld [vmem:[#allocation7 + $0x8] sm:$0xf]
    %v275 = vld [vmem:[#allocation7 + $0xc] sm:$0xf]
    %v276 = vld [vmem:[#allocation7 + $0x10] sm:$0xf]
    %v277 = vld [vmem:[#allocation7 + $0x14] sm:$0xf]
    %v278 = vld [vmem:[#allocation7 + $0x18] sm:$0xf]
    %v279 = vld [vmem:[#allocation7 + $0x1c] sm:$0xf]
    %v280 = vld [vmem:[#allocation7 + $0x20] sm:$0xf]
    %v281 = vld [vmem:[#allocation7 + $0x24] sm:$0xf]
    %v282 = vld [vmem:[#allocation7 + $0x28] sm:$0xf]
    %v283 = vld [vmem:[#allocation7 + $0x2c] sm:$0xf]
    %v284 = vld [vmem:[#allocation7 + $0x30] sm:$0xf]
    %v285 = vld [vmem:[#allocation7 + $0x34] sm:$0xf]
    %v286 = vld [vmem:[#allocation7 + $0x38] sm:$0xf]
    %v287 = vld [vmem:[#allocation7 + $0x3c] sm:$0xf]
    %v288 = vld [vmem:[%s5] sm:$0x1]
    %v290 = vlaneseq
    %v291 = vshrl.u32 %v290, 7
    %v292 = vsub.s32 0, %v291
    %v293 = vrot.slane %v288, %v292
    %v311 = vunpack.c.l.b16 %v272
    %v312 = vunpack.c.l.b16 %v273
    %v313 = vunpack.c.l.b16 %v274
    %v314 = vunpack.c.l.b16 %v275
    %v315 = vunpack.c.l.b16 %v276
    %v316 = vunpack.c.l.b16 %v277
    %v317 = vunpack.c.l.b16 %v278
    %v318 = vunpack.c.l.b16 %v279
    %v319 = vunpack.c.l.b16 %v280
    %v320 = vunpack.c.l.b16 %v281
    %v321 = vunpack.c.l.b16 %v282
    %v322 = vunpack.c.l.b16 %v283
    %v323 = vunpack.c.l.b16 %v284
    %v324 = vunpack.c.l.b16 %v285
    %v325 = vunpack.c.l.b16 %v286
    %v326 = vunpack.c.l.b16 %v287
    %v327 = vpack.c.b16 %v312, %v311
    %v328 = vpack.c.b16 %v314, %v313
    %v329 = vpack.c.b16 %v316, %v315
    %v330 = vpack.c.b16 %v318, %v317
    %v331 = vpack.c.b16 %v320, %v319
    %v332 = vpack.c.b16 %v322, %v321
    %v333 = vpack.c.b16 %v324, %v323
    %v334 = vpack.c.b16 %v326, %v325
    %343 = vmatprep.subr.bf16.mxu0 0
    %344 = vmatpush1.bf16.msra.mxu0 %v327
    %345 = vmatprep.subr.bf16.mxu0 0
    %346 = vmatpush1.bf16.msra.mxu0 %v328
    %347 = vmatprep.subr.bf16.mxu0 0
    %348 = vmatpush1.bf16.msra.mxu0 %v329
    %349 = vmatprep.subr.bf16.mxu0 0
    %350 = vmatpush1.bf16.msra.mxu0 %v330
    %351 = vmatprep.subr.bf16.mxu0 0
    %352 = vmatpush1.bf16.msra.mxu0 %v331
    %353 = vmatprep.subr.bf16.mxu0 0
    %354 = vmatpush1.bf16.msra.mxu0 %v332
    %355 = vmatprep.subr.bf16.mxu0 0
    %356 = vmatpush1.bf16.msra.mxu0 %v333
    %357 = vmatprep.subr.bf16.mxu0 0
    %358 = vmatpush1.bf16.msra.mxu0 %v334
    %359 = vmatprep.subr.bf16.mxu0 0
    %360 = vmatpush1.bf16.msra.mxu0 0
    %361 = vmatprep.subr.bf16.mxu0 0
    %362 = vmatpush1.bf16.msra.mxu0 0
    %363 = vmatprep.subr.bf16.mxu0 0
    %364 = vmatpush1.bf16.msra.mxu0 0
    %365 = vmatprep.subr.bf16.mxu0 0
    %366 = vmatpush1.bf16.msra.mxu0 0
    %367 = vmatprep.subr.bf16.mxu0 0
    %368 = vmatpush1.bf16.msra.mxu0 0
    %369 = vmatprep.subr.bf16.mxu0 0
    %370 = vmatpush1.bf16.msra.mxu0 0
    %371 = vmatprep.subr.bf16.mxu0 0
    %372 = vmatpush1.bf16.msra.mxu0 0
    %373 = vmatprep.subr.bf16.mxu0 0
    %374 = vmatpush1.bf16.msra.mxu0 0
    %375 = vmatprep.mubr.bf16.mxu0 0
    %376 = vmatmul.mubr.bf16.gmra.mrb[0].mxu0 %v271
    %v377 = vpop.f32.mrb[0].mxu0
    %v378 = vadd.f32 %v293, %v377
    %v379 = vpop.f32.mrb[0].mxu0
    %v380 = vpop.f32.mrb[0].mxu0
    %v381 = vpop.f32.mrb[0].mxu0
    %382 = vdwg.mxu0
    %383 = vst [vmem:[%s6] sm:$0xff] %v378
    // Predicated region
    $region42: #{actor_forward.1} parent=1 // pred_check
      _
    $region43: #{actor_forward.1} parent=1 // pred_check_branch
      %385 = sbr.rel (0) target = $region45
    $region44: #{actor_forward.1} parent=1 // pred_region
      _
    $region45: #{actor_forward.1} parent=1 // pred_fallthru
      _
    // Predicated region
    $region46: #{actor_forward.1} parent=1 // pred_check
      _
    $region47: #{actor_forward.1} parent=1 // pred_check_branch
      %387 = sbr.rel (0) target = $region49
    $region48: #{actor_forward.1} parent=1 // pred_region
      _
    $region49: #{actor_forward.1} parent=1 // pred_fallthru
      _
    %388 = vsyncpa [#allocation3], 1
    %389 = vsyncpa [#allocation5], 1
    %390 = vsyncpa [#allocation8], 1

</llo_original>
